<compile_context>
chip_gen: v7x
topology: tpu7x:2x2x1
jax: 0.10.0
libtpu: 0.0.40
codegen_flags: <defaults>
</compile_context>

<pallas_src>
import functools

import jax
import jax.numpy as jnp
from jax.experimental import pallas as pl
from jax.experimental.pallas import tpu as pltpu

_LANE = 128
_LANES_PREF = (1024, 512, 256, 128)       # preferred lane-dense row widths
_TARGET_BLOCK_BYTES = 4 * 1024 * 1024     # ~4 MiB per input per block
_VMEM_LIMIT_BYTES = 32 * 1024 * 1024      # 2 inputs x 2 bufs x 4 MiB + headroom
_MIN_PALLAS_BYTES = 256 * 1024            # below this: pure-XLA fast path
_MAX_C = 65536                            # widest row we will tile in VMEM


def _kl_partial_kernel(mean_ref, var_ref, out_ref, *, rows_total, needs_mask):
    tb, c = mean_ref.shape
    m = mean_ref[...].astype(jnp.float32)
    v = var_ref[...].astype(jnp.float32)

    if needs_mask:
        # Rows >= rows_total in the partial last block hold undefined data.
        # Neutralize BEFORE the log (mean->0, var->1 => term == 0 exactly), so
        # garbage can never produce NaN/-inf in the partial sums.
        row0 = pl.program_id(0) * tb
        row_idx = row0 + jax.lax.broadcasted_iota(jnp.int32, (tb, 1), 0)
        valid = row_idx < rows_total                       # (tb, 1), broadcasts
        m = jnp.where(valid, m, 0.0)
        v = jnp.where(valid, v, 1.0)

    term = 1.0 + jnp.log(v) - m * m - v                    # VPU + EUP, f32

    # Sublane fold: (tb, c) -> (tb//8, 8, c) is a tile-aligned view (tb % 8 == 0
    # guaranteed by the wrapper on this path) followed by pure VPU vreg adds.
    if tb % 8 == 0:
        part = term.reshape(tb // 8, 8, c).sum(axis=0)     # (8, c)
    else:
        # Rare tiny-rows path (single block == whole array, < 8 rows).
        part = jnp.sum(term, axis=0, keepdims=True)        # (1, c)

    # Lane fold: add the c//128 lane-aligned columns via static slices
    # (copy-free vreg adds) -> 8x smaller writeback and trailing XLA reduce.
    if c % _LANE == 0 and c > _LANE:
        acc = part[:, 0:_LANE]
        for g in range(1, c // _LANE):
            acc = acc + part[:, g * _LANE:(g + 1) * _LANE]
        part = acc

    out_ref[...] = part[None]                              # (1, out_rows, out_cols)


def _kl_term_sum_xla(mean, var):
    m = mean.astype(jnp.float32)
    v = var.astype(jnp.float32)
    return jnp.sum(1.0 + jnp.log(v) - m * m - v)


def kl_loss(mean, var, *, min_pallas_bytes=_MIN_PALLAS_BYTES):
    """KL = -0.5 / mean.shape[0] * sum(1 + log(var) - mean**2 - var)."""
    assert mean.shape == var.shape, (mean.shape, var.shape)
    batch = mean.shape[0] if mean.ndim >= 1 else 1
    scale = jnp.float32(-0.5 / batch)

    n = mean.size
    itemsize = jnp.dtype(mean.dtype).itemsize

    # ---- tiny inputs: pure-XLA fast path (kernel launch is pure overhead) ----
    if n * itemsize < min_pallas_bytes:
        return _kl_term_sum_xla(mean, var) * scale

    # ---- zero-copy 2-D presentation (reshape of contiguous data only) -------
    c = None
    for cand in _LANES_PREF:
        if n % cand == 0:
            c = cand
            break
    if c is None:
        # Natural collapse; full-last-dim blocks are allowed for any width.
        c = n // mean.shape[0] if mean.ndim >= 2 else n
    if c > _MAX_C:
        # TODO(synk): rows too wide to tile in VMEM (degenerate shape); XLA path.
        return _kl_term_sum_xla(mean, var) * scale

    rows = n // c
    m2 = mean.reshape(rows, c)
    v2 = var.reshape(rows, c)

    # dtype-aware sublane packing: 8 rows (f32), 16 (bf16/f16), 32 (int8/fp8).
    sub = 8 * max(1, 4 // itemsize)
    tb = (_TARGET_BLOCK_BYTES // (c * itemsize)) // sub * sub
    tb = max(sub, tb)
    if tb >= rows:
        tb = rows                      # single full-extent block (always legal)

    num_blocks = pl.cdiv(rows, tb)
    needs_mask = (num_blocks * tb) != rows

    out_rows = 8 if (tb % 8 == 0) else 1
    out_cols = _LANE if (c % _LANE == 0) else c

    kernel = functools.partial(
        _kl_partial_kernel, rows_total=rows, needs_mask=needs_mask)

    partials = pl.pallas_call(
        kernel,
        out_shape=jax.ShapeDtypeStruct((num_blocks, out_rows, out_cols),
                                       jnp.float32),
        grid=(num_blocks,),
        in_specs=[
            pl.BlockSpec((tb, c), lambda i: (i, 0)),
            pl.BlockSpec((tb, c), lambda i: (i, 0)),
        ],
        out_specs=pl.BlockSpec((1, out_rows, out_cols), lambda i: (i, 0, 0)),
        compiler_params=pltpu.CompilerParams(
            dimension_semantics=("parallel",),
            vmem_limit_bytes=_VMEM_LIMIT_BYTES,
        ),
    )(m2, v2)

    # Tiny final reduction + scale (XLA).
    return jnp.sum(partials) * scale


def kl_loss_ref(mean, var):
    m = mean.astype(jnp.float32)
    v = var.astype(jnp.float32)
    return -0.5 / mean.shape[0] * jnp.sum(1.0 + jnp.log(v) - m * m - v)


if __name__ == "__main__":
    key = jax.random.PRNGKey(0)
    ks = jax.random.split(key, 8)

    # 1) Module-scale case (batch=2, hidden=32): tiny -> XLA fast path.
    mean = jax.random.normal(ks[0], (2, 32), jnp.float32)
    var = jnp.exp(0.5 * jax.random.normal(ks[1], (2, 32), jnp.float32))
    out = jax.block_until_ready(kl_loss(mean, var))
    ref = kl_loss_ref(mean, var)
    assert jnp.allclose(out, ref, rtol=1e-5, atol=1e-5), (out, ref)

    # 2) Same tiny case forced through the Pallas kernel (full-extent block).
    out = jax.block_until_ready(kl_loss(mean, var, min_pallas_bytes=0))
    assert jnp.allclose(out, ref, rtol=1e-5, atol=1e-5), (out, ref)

    # 3) Width not divisible by 128: zero-copy natural collapse, one block.
    mean3 = jax.random.normal(ks[2], (520, 1037), jnp.float32)
    var3 = jnp.exp(0.5 * jax.random.normal(ks[3], (520, 1037), jnp.float32))
    out3 = jax.block_until_ready(kl_loss(mean3, var3))
    ref3 = kl_loss_ref(mean3, var3)
    assert jnp.allclose(out3, ref3, rtol=1e-3, atol=1e-3), (out3, ref3)

    # 4) Lane-dense multi-block grid with a masked partial last block.
    mean4 = jax.random.normal(ks[4], (1500, 1024), jnp.float32)
    var4 = jnp.exp(0.5 * jax.random.normal(ks[5], (1500, 1024), jnp.float32))
    out4 = jax.block_until_ready(kl_loss(mean4, var4))
    ref4 = kl_loss_ref(mean4, var4)
    assert jnp.allclose(out4, ref4, rtol=1e-3, atol=1e-3), (out4, ref4)

    # 5) bf16 inputs (16-row sublane packing).
    mean5 = jax.random.normal(ks[6], (256, 4096), jnp.float32).astype(jnp.bfloat16)
    var5 = jnp.exp(0.5 * jax.random.normal(ks[7], (256, 4096),
                                           jnp.float32)).astype(jnp.bfloat16)
    out5 = jax.block_until_ready(kl_loss(mean5, var5))
    ref5 = kl_loss_ref(mean5, var5)
    assert jnp.allclose(out5, ref5, rtol=1e-3, atol=1e-3), (out5, ref5)

    print("KERNEL_OK")
</pallas_src>

<mosaic_0001>
module attributes {stable_mosaic.version = 11 : i64} {
  func.func @_kl_partial_kernel(%arg0: i32, %arg1: memref<2x32xf32, #tpu.memory_space<vmem>>, %arg2: memref<2x32xf32, #tpu.memory_space<vmem>>, %arg3: memref<1x1x32xf32, #tpu.memory_space<vmem>>) attributes {dimension_semantics = [#tpu.dimension_semantics<parallel>], iteration_bounds = array<i64: 1>, scalar_prefetch = 0 : i64, scratch_operands = 0 : i64, tpu.core_type = #tpu.core_type<tc>, window_params = [{transform_indices = @transform_0, window_bounds = array<i64: 2, 32>}, {transform_indices = @transform_1, window_bounds = array<i64: 2, 32>}, {transform_indices = @transform_2, window_bounds = array<i64: 1, 1, 32>}]} {
    %c0 = arith.constant 0 : index
    %c0_0 = arith.constant 0 : index
    %0 = vector.load %arg1[%c0, %c0_0] : memref<2x32xf32, #tpu.memory_space<vmem>>, vector<2x32xf32>
    %c0_1 = arith.constant 0 : index
    %c0_2 = arith.constant 0 : index
    %1 = vector.load %arg2[%c0_1, %c0_2] : memref<2x32xf32, #tpu.memory_space<vmem>>, vector<2x32xf32>
    %2 = math.log %1 : vector<2x32xf32>
    %cst = arith.constant 1.000000e+00 : f32
    %3 = vector.broadcast %cst : f32 to vector<2x32xf32>
    %4 = arith.addf %3, %2 : vector<2x32xf32>
    %5 = arith.mulf %0, %0 : vector<2x32xf32>
    %6 = arith.subf %4, %5 : vector<2x32xf32>
    %7 = arith.subf %6, %1 : vector<2x32xf32>
    %cst_3 = arith.constant dense<0.000000e+00> : vector<32xf32>
    %8 = vector.multi_reduction <add>, %7, %cst_3 [0] : vector<2x32xf32> to vector<32xf32>
    %9 = vector.shape_cast %8 : vector<32xf32> to vector<1x32xf32>
    %10 = vector.shape_cast %9 : vector<1x32xf32> to vector<1x1x32xf32>
    %c0_4 = arith.constant 0 : index
    %c0_5 = arith.constant 0 : index
    %c0_6 = arith.constant 0 : index
    %11 = vector.load %arg3[%c0_4, %c0_5, %c0_6] : memref<1x1x32xf32, #tpu.memory_space<vmem>>, vector<1x1x32xf32>
    tpu.vector_store %arg3[%c0_4, %c0_5, %c0_6], %10 {strides = array<i32>} : memref<1x1x32xf32, #tpu.memory_space<vmem>>, vector<1x1x32xf32>,
    return
  }
  func.func @transform_0(%arg0: i32) -> (i32, i32) {
    %c0_i32 = arith.constant 0 : i32
    %c0_i32_0 = arith.constant 0 : i32
    return %arg0, %c0_i32 : i32, i32
  }
  func.func @transform_1(%arg0: i32) -> (i32, i32) {
    %c0_i32 = arith.constant 0 : i32
    %c0_i32_0 = arith.constant 0 : i32
    return %arg0, %c0_i32 : i32, i32
  }
  func.func @transform_2(%arg0: i32) -> (i32, i32, i32) {
    %c0_i32 = arith.constant 0 : i32
    %c0_i32_0 = arith.constant 0 : i32
    %c0_i32_1 = arith.constant 0 : i32
    return %arg0, %c0_i32, %c0_i32_0 : i32, i32, i32
  }
}

</mosaic_0001>

<llo_original>
// kernel: tpu_custom_call.1
$region0: #{tpu_custom_call.1}
  #allocation0 [shape = 'u32[]', space=smem, size = 0x4, offset = 0x4, fixed_abs, tag = 'smem constant byte address 0x4 - core index']
  #allocation1 [shape = 'u32[144,128]{1,0:T(1,128)}', space=vmem, size = 0x12000, scoped, tag = 'internal scratch']
  %s0 = inlined_call_operand.hbm [shape: f32[2,32], index: 0, kind: input, shape index: {}]
  %s1 = inlined_call_operand.vmem [shape: f32[2,32], index: 1, kind: input, shape index: {}]
  %s2 = inlined_call_operand.hbm [shape: f32[1,1,32], index: 2, kind: output, shape index: {}]
  %s3 = sld [smem:[#allocation0]]
  $region22: #{tpu_custom_call.1} parent=0
    _
  %s5 = ssub.s32 1, %s3
  %s6 = scalar_select 0, %s5, %s3
  $region1: #{tpu_custom_call.1} parent=0
    #allocation2 [shape = 'u8[1024]{0}', space=vmem, size = 0x400, scoped, tag = 'input window, operand 0, single buffered']
    #allocation3 [shape = 's32[1]{0}', space=sflag, size = 0x4, scoped, tag = 'scoped memory for tpu_custom_call.1']
    #allocation4 [shape = 's32[1]{0}', space=sflag, size = 0x4, scoped, tag = 'scoped memory for tpu_custom_call.1']
    #allocation5 [shape = 'u8[512]{0}', space=vmem, size = 0x400, scoped, tag = 'output window, operand 0, single buffered']
    %7 = vsyncpa [#allocation3], 0
    %8 = vsyncpa [#allocation4], 0
    // Predicated region
    $region2: #{tpu_custom_call.1} parent=1 // pred_check
      _
    $region3: #{tpu_custom_call.1} parent=1 // pred_check_branch
      %10 = sbr.rel (0) target = $region5
    $region4: #{tpu_custom_call.1} parent=1 // pred_region
      %s12 = ssub.s32 32, 32
      %13 = vsyncadd [#allocation3], %s12
      %s15 = sshll.u32 [#allocation2], 4
      %s16 = int_to_ptr.vmem [resolvable:$true] %s15
      %18 = dma.hbm_to_vmem [thread:$0]  %s0, 32, %s16, [#allocation3]
    $region5: #{tpu_custom_call.1} parent=1 // pred_fallthru
      _
    // Predicated region
    $region6: #{tpu_custom_call.1} parent=1 // pred_check
      _
    $region7: #{tpu_custom_call.1} parent=1 // pred_check_branch
      %20 = sbr.rel (0) target = $region9
    $region8: #{tpu_custom_call.1} parent=1 // pred_region
      _
    $region9: #{tpu_custom_call.1} parent=1 // pred_fallthru
      _
    // Predicated region
    $region10: #{tpu_custom_call.1} parent=1 // pred_check
      _
    $region11: #{tpu_custom_call.1} parent=1 // pred_check_branch
      %22 = sbr.rel (0) target = $region13
    $region12: #{tpu_custom_call.1} parent=1 // pred_region
      %23 = dma.done [#allocation3], 32
    $region13: #{tpu_custom_call.1} parent=1 // pred_fallthru
      _
    %v24 = vld [vmem:[#allocation2] sm:$0x3]
    %v25 = vld [vmem:[%s1] sm:$0x3]
    %v26 = vlog2.pop %v25
    %v27 = vmul.f32 %v26, 0.6931472
    %v28 = vadd.f32 %v27, 1.0
    %v29 = vmul.f32 %v24, %v24
    %v30 = vsub.f32 %v28, %v29
    %v31 = vsub.f32 %v30, %v25
    %vm32 = vcmask 254976
    %v33 = vsel %vm32, %v31, 0.0
    %v34 = vrot.slane %v33, 4
    %v35 = vadd.f32 %v33, %v34
    %v36 = vrot.slane %v35, 2
    %v37 = vadd.f32 %v35, %v36
    %v38 = vrot.slane %v37, 1
    %v39 = vadd.f32 %v37, %v38
    %vm40 = vcmask 253952
    %41 = vst.msk [vmem:[#allocation5] sm:$0x1] %vm40, %v39
    // Predicated region
    $region14: #{tpu_custom_call.1} parent=1 // pred_check
      _
    $region15: #{tpu_custom_call.1} parent=1 // pred_check_branch
      %43 = sbr.rel (0) target = $region17
    $region16: #{tpu_custom_call.1} parent=1 // pred_region
      %s45 = ssub.s32 16, 16
      %46 = vsyncadd [#allocation4], %s45
      %s48 = sshll.u32 [#allocation5], 4
      %s49 = int_to_ptr.vmem [resolvable:$true] %s48
      %51 = dma.vmem_to_hbm [thread:$0]  %s49, 16, %s2, [#allocation4]
    $region17: #{tpu_custom_call.1} parent=1 // pred_fallthru
      _
    // Predicated region
    $region18: #{tpu_custom_call.1} parent=1 // pred_check
      _
    $region19: #{tpu_custom_call.1} parent=1 // pred_check_branch
      %53 = sbr.rel (0) target = $region21
    $region20: #{tpu_custom_call.1} parent=1 // pred_region
      %54 = dma.done [#allocation4], 16
    $region21: #{tpu_custom_call.1} parent=1 // pred_fallthru
      _
    %55 = vsyncpa [#allocation3], 1
    %56 = vsyncpa [#allocation4], 1

</llo_original>
